<compile_context>
chip_gen: v6e
topology: v6e:2x2x1
jax: 0.10.0
libtpu: 0.0.40
codegen_flags: <defaults>
</compile_context>

<pallas_src>
from functools import partial

import jax
import jax.numpy as jnp
from jax.experimental import pallas as pl
from jax.experimental.pallas import tpu as pltpu


def _reduction_kernel(x_ref, w_ref, shift_ref, o_ref, *, negative_slope):
    # x_ref:     (1, C_in, T_L)  activation tile, native (N, C_in, L) layout
    # w_ref:     (C_out, C_in)   bf16 BN-folded conv weight (grid-invariant)
    # shift_ref: (C_out, 1)      f32 BN shift (grid-invariant)
    # o_ref:     (1, C_out, T_L) output tile
    x = x_ref[0].astype(jnp.bfloat16)          # VPU cast, hidden under the DMA
    y = jnp.dot(w_ref[...], x, preferred_element_type=jnp.float32)   # MXU, f32 acc
    y = y + shift_ref[...]                     # broadcast shift over lanes
    if negative_slope == 0.0:
        y = jnp.maximum(y, 0.0)                # ReLU
    else:
        y = jnp.where(y > 0, y, negative_slope * y)   # LeakyReLU
    o_ref[0] = y.astype(o_ref.dtype)


def _pick_lane_tile(L, target):
    """Largest multiple-of-128 divisor of L that is <= target, else L itself."""
    if L <= target:
        return L
    if L % 128 == 0:
        t = (target // 128) * 128
        while t >= 128:
            if L % t == 0:
                return t
            t -= 128
    # TODO(synk): very large L with no multiple-of-128 divisor falls back to a
    #             single full-L tile; a masked-store ragged tail tile would be
    #             needed to sub-tile such shapes without a pad pass.
    return L


def reduction_forward(x, w, gamma, beta, running_mean, running_var,
                      eps=1e-5, negative_slope=0.0, block_l=2048,
                      out_dtype=jnp.float32):
    """x: (N, C_in, L) -> (N, C_out, L).  Conv1d(k=1, no bias) + BN1d(eval) + act."""
    N, C_in, L = x.shape
    C_out = w.shape[0]

    # Fold BatchNorm1d (inference) into the conv weight + per-channel shift:
    #   gamma/sqrt(var+eps) * (W @ x - mean) + beta == (scale*W) @ x + shift
    # Folding is done in f32; only the final (tiny, grid-invariant) weight is
    # cast to bf16 for the MXU.  The shift stays f32.
    scale = gamma.astype(jnp.float32) / jnp.sqrt(running_var.astype(jnp.float32) + eps)
    w_folded = (w.astype(jnp.float32) * scale[:, None]).astype(jnp.bfloat16)  # (C_out, C_in)
    shift = (beta.astype(jnp.float32)
             - running_mean.astype(jnp.float32) * scale).reshape(C_out, 1)

    # Lane tile over L in the native layout.  Cap the tile so the
    # double-buffered in+out tiles stay well inside VMEM on every chip.
    x_itemsize = jnp.dtype(x.dtype).itemsize
    o_itemsize = jnp.dtype(out_dtype).itemsize
    vmem_budget = 40 * 1024 * 1024
    max_lane = max(128, vmem_budget // (2 * (C_in * x_itemsize + C_out * o_itemsize)))
    target = max(128, min(block_l, (max_lane // 128) * 128))
    if N == 1 and L >= 256:
        # Keep >= 2 grid steps so both v7x TensorCores get work.
        target = min(target, (((L + 1) // 2 + 127) // 128) * 128)
    T_L = _pick_lane_tile(L, target)
    grid = (N, L // T_L)

    # Scoped-VMEM limit: ~2x the actual double-buffered footprint, capped well
    # below v7x's 64 MiB physical VMEM.
    x_bytes = C_in * T_L * x_itemsize
    o_bytes = C_out * T_L * o_itemsize
    vmem_need = 2 * (x_bytes + o_bytes) + 2 * (C_out * C_in * 2 + C_out * 4)
    vmem_limit = int(min(48 * 1024 * 1024, max(16 * 1024 * 1024, 2 * vmem_need)))

    kernel = partial(_reduction_kernel, negative_slope=float(negative_slope))

    # NOTE: if profiling on v6e shows exposed DMA at this tile size, add
    # pipeline_mode=pl.Buffered(3) to the activation/output BlockSpecs instead
    # of shrinking T_L.
    return pl.pallas_call(
        kernel,
        out_shape=jax.ShapeDtypeStruct((N, C_out, L), out_dtype),
        grid_spec=pltpu.PrefetchScalarGridSpec(
            num_scalar_prefetch=0,
            grid=grid,
            in_specs=[
                pl.BlockSpec((1, C_in, T_L), lambda n, m: (n, 0, m)),   # x, native layout
                pl.BlockSpec((C_out, C_in), lambda n, m: (0, 0)),       # folded weight
                pl.BlockSpec((C_out, 1), lambda n, m: (0, 0)),          # BN shift
            ],
            out_specs=pl.BlockSpec((1, C_out, T_L), lambda n, m: (n, 0, m)),
        ),
        compiler_params=pltpu.CompilerParams(
            dimension_semantics=("parallel", "parallel"),
            vmem_limit_bytes=vmem_limit,
        ),
    )(x, w_folded, shift)


if __name__ == "__main__":
    # Small shapes consistent with the module (input_dim -> output_dim over a length axis).
    N, C_in, C_out, L = 2, 32, 16, 128
    eps = 1e-5

    key = jax.random.PRNGKey(0)
    kx, kw, kg, kb, km, kv = jax.random.split(key, 6)

    x = jax.random.normal(kx, (N, C_in, L), dtype=jnp.float32)

    # Deterministic synthetic parameters with non-trivial running statistics.
    w = jax.random.normal(kw, (C_out, C_in), dtype=jnp.float32) * (1.0 / jnp.sqrt(C_in))
    gamma = 1.0 + 0.1 * jax.random.normal(kg, (C_out,), dtype=jnp.float32)
    beta = 0.1 * jax.random.normal(kb, (C_out,), dtype=jnp.float32)
    running_mean = 0.1 * jax.random.normal(km, (C_out,), dtype=jnp.float32)
    running_var = 0.5 + jax.random.uniform(kv, (C_out,), dtype=jnp.float32)

    out = reduction_forward(x, w, gamma, beta, running_mean, running_var, eps=eps)
    out = jax.block_until_ready(out)
    assert out.shape == (N, C_out, L)

    scale = gamma / jnp.sqrt(running_var + eps)
    shift = beta - running_mean * scale

    # Reference 1: same bf16-cast operands, f32 accumulate (tight tolerance;
    # matches the kernel's bf16-MXU / f32-accumulate numerics).
    w_bf = (w * scale[:, None]).astype(jnp.bfloat16).astype(jnp.float32)
    x_bf = x.astype(jnp.bfloat16).astype(jnp.float32)
    ref_bf = jnp.maximum(
        jnp.einsum("oc,ncl->nol", w_bf, x_bf) + shift[None, :, None], 0.0)
    assert jnp.allclose(out, ref_bf, atol=5e-3, rtol=5e-3)

    # Reference 2: full-f32 PyTorch semantics (loose tolerance due to bf16 matmul).
    conv = jnp.einsum("oc,ncl->nol", w, x)
    ref_f32 = jnp.maximum(
        (conv - running_mean[None, :, None])
        / jnp.sqrt(running_var + eps)[None, :, None]
        * gamma[None, :, None]
        + beta[None, :, None],
        0.0,
    )
    assert jnp.allclose(out, ref_f32, atol=5e-2, rtol=5e-2)

    # LeakyReLU(0.1) path ('leaky_relu' activation option of the module).
    out_lrelu = reduction_forward(x, w, gamma, beta, running_mean, running_var,
                                  eps=eps, negative_slope=0.1)
    out_lrelu = jax.block_until_ready(out_lrelu)
    pre = jnp.einsum("oc,ncl->nol", w_bf, x_bf) + shift[None, :, None]
    ref_lrelu = jnp.where(pre > 0, pre, 0.1 * pre)
    assert jnp.allclose(out_lrelu, ref_lrelu, atol=5e-3, rtol=5e-3)

    print("KERNEL_OK")
</pallas_src>

<mosaic_0001>
module attributes {stable_mosaic.version = 11 : i64} {
  func.func @_reduction_kernel(%arg0: i32, %arg1: i32, %arg2: memref<1x32x128xf32, #tpu.memory_space<vmem>>, %arg3: memref<16x32xbf16, #tpu.memory_space<vmem>>, %arg4: memref<16x1xf32, #tpu.memory_space<vmem>>, %arg5: memref<1x16x128xf32, #tpu.memory_space<vmem>>) attributes {dimension_semantics = [#tpu.dimension_semantics<parallel>, #tpu.dimension_semantics<parallel>], iteration_bounds = array<i64: 2, 1>, scalar_prefetch = 0 : i64, scratch_operands = 0 : i64, tpu.core_type = #tpu.core_type<tc>, window_params = [{transform_indices = @transform_0, window_bounds = array<i64: 1, 32, 128>}, {pipeline_mode = #tpu.pipeline_mode<synchronous>, transform_indices = @transform_1, window_bounds = array<i64: 16, 32>}, {pipeline_mode = #tpu.pipeline_mode<synchronous>, transform_indices = @transform_2, window_bounds = array<i64: 16, 1>}, {transform_indices = @transform_3, window_bounds = array<i64: 1, 16, 128>}]} {
    %c0 = arith.constant 0 : index
    %c0_0 = arith.constant 0 : index
    %c0_1 = arith.constant 0 : index
    %0 = vector.load %arg2[%c0, %c0_0, %c0_1] : memref<1x32x128xf32, #tpu.memory_space<vmem>>, vector<1x32x128xf32>
    %1 = vector.shape_cast %0 : vector<1x32x128xf32> to vector<32x128xf32>
    %2 = arith.truncf %1 : vector<32x128xf32> to vector<32x128xbf16>
    %c0_2 = arith.constant 0 : index
    %c0_3 = arith.constant 0 : index
    %3 = vector.load %arg3[%c0_2, %c0_3] : memref<16x32xbf16, #tpu.memory_space<vmem>>, vector<16x32xbf16>
    %cst = arith.constant dense<0.000000e+00> : vector<16x128xf32>
    %4 = tpu.matmul %3, %2, %cst {dimension_numbers = #tpu.dot_dimension_numbers<[1], [0], [0], [1], [0, 0, 1, 1], [], []>} : vector<16x32xbf16>, vector<32x128xbf16>, vector<16x128xf32> -> vector<16x128xf32>
    %c0_4 = arith.constant 0 : index
    %c0_5 = arith.constant 0 : index
    %5 = vector.load %arg4[%c0_4, %c0_5] : memref<16x1xf32, #tpu.memory_space<vmem>>, vector<16x1xf32>
    %6 = vector.broadcast %5 : vector<16x1xf32> to vector<16x128xf32>
    %7 = arith.addf %4, %6 : vector<16x128xf32>
    %cst_6 = arith.constant 0.000000e+00 : f32
    %8 = vector.broadcast %cst_6 : f32 to vector<16x128xf32>
    %9 = arith.maximumf %7, %8 : vector<16x128xf32>
    %c0_7 = arith.constant 0 : index
    %c0_8 = arith.constant 0 : index
    %c0_9 = arith.constant 0 : index
    %10 = vector.load %arg5[%c0_7, %c0_8, %c0_9] : memref<1x16x128xf32, #tpu.memory_space<vmem>>, vector<1x16x128xf32>
    %11 = vector.shape_cast %10 : vector<1x16x128xf32> to vector<16x128xf32>
    %12 = vector.shape_cast %9 : vector<16x128xf32> to vector<1x16x128xf32>
    tpu.vector_store %arg5[%c0_7, %c0_8, %c0_9], %12 {strides = array<i32>} : memref<1x16x128xf32, #tpu.memory_space<vmem>>, vector<1x16x128xf32>,
    return
  }
  func.func @transform_0(%arg0: i32, %arg1: i32) -> (i32, i32, i32) {
    %c0_i32 = arith.constant 0 : i32
    %c0_i32_0 = arith.constant 0 : i32
    return %arg0, %c0_i32, %arg1 : i32, i32, i32
  }
  func.func @transform_1(%arg0: i32, %arg1: i32) -> (i32, i32) {
    %c0_i32 = arith.constant 0 : i32
    %c0_i32_0 = arith.constant 0 : i32
    %c0_i32_1 = arith.constant 0 : i32
    return %c0_i32, %c0_i32_0 : i32, i32
  }
  func.func @transform_2(%arg0: i32, %arg1: i32) -> (i32, i32) {
    %c0_i32 = arith.constant 0 : i32
    %c0_i32_0 = arith.constant 0 : i32
    %c0_i32_1 = arith.constant 0 : i32
    return %c0_i32, %c0_i32_0 : i32, i32
  }
  func.func @transform_3(%arg0: i32, %arg1: i32) -> (i32, i32, i32) {
    %c0_i32 = arith.constant 0 : i32
    %c0_i32_0 = arith.constant 0 : i32
    return %arg0, %c0_i32, %arg1 : i32, i32, i32
  }
}

</mosaic_0001>

<llo_original>
// kernel: tpu_custom_call.1
$region0: #{tpu_custom_call.1}
  #allocation0 [shape = 'u32[]', space=smem, size = 0x4, offset = 0x4, fixed_abs, tag = 'smem constant byte address 0x4 - core index']
  #allocation1 [shape = 'u32[144,128]{1,0:T(1,128)}', space=vmem, size = 0x12000, scoped, tag = 'internal scratch']
  %s0 = inlined_call_operand.hbm [shape: f32[2,32,128], index: 0, kind: input, shape index: {}]
  %s1 = inlined_call_operand.vmem [shape: bf16[16,32], index: 1, kind: input, shape index: {}]
  %s2 = inlined_call_operand.vmem [shape: f32[16,1], index: 2, kind: input, shape index: {}]
  %s3 = inlined_call_operand.hbm [shape: f32[2,16,128], index: 3, kind: output, shape index: {}]
  %s4 = sld [smem:[#allocation0]]
  $region49: #{tpu_custom_call.1} parent=0
    _
  %s6 = ssub.s32 1, %s4
  %s7 = scalar_select 0, %s6, %s4
  $region1: #{tpu_custom_call.1} parent=0
    #allocation2 [shape = 'u8[32768]{0}', space=vmem, size = 0x8000, scoped, tag = 'input window, operand 0']
    #allocation3 [shape = 's32[2]{0}', space=sflag, size = 0x8, scoped, tag = 'scoped memory for tpu_custom_call.1']
    #allocation4 [shape = 's32[2]{0}', space=sflag, size = 0x8, scoped, tag = 'scoped memory for tpu_custom_call.1']
    #allocation5 [shape = 'u8[16384]{0}', space=vmem, size = 0x4000, scoped, tag = 'output window, operand 0']
    %8 = vsyncpa [#allocation3], 0
    %s9 = scalar_lea.sflag [#allocation3], 1
    %10 = vsyncpa %s9, 0
    %11 = vsyncpa [#allocation4], 0
    %s12 = scalar_lea.sflag [#allocation4], 1
    %13 = vsyncpa %s12, 0
    loop: start=0, step=1, limit=4
    $region2: #{tpu_custom_call.1} parent=1 // loop_pre_header
      _
    $region3: #{tpu_custom_call.1} parent=1 // loop_header
      %s15 = sphi 0, %s19
      %p16 = scmp.ge.s32.totalorder %s15, 4
      %s22 = sphi 0, %s34
      %s23 = sphi 0, %s30
      %s24 = sphi 0, %s22
      %s25 = sphi 0, %s23
      %s26 = sphi 0, %s24
      %s27 = sphi 0, %s25
      %s39 = sphi 0, %s41
      %s42 = sphi 0, %s39
      %s43 = sphi 0, %s42
      %s59 = sphi 0, %s43
      %s63 = sphi 0, %s63
      %s65 = sphi 0, %s63
      %s66 = sphi 0, %s65
      %s80 = sphi 0, %s66
      %s84 = sphi 0, %s84
      %s86 = sphi 0, %s84
      %s87 = sphi 0, %s86
      %s101 = sphi 0, %s87
      %s109 = sphi 0, %s111
      %s112 = sphi 0, %s109
      %s113 = sphi 0, %s112
      %s129 = sphi 0, %s113
    $region4: #{tpu_custom_call.1} parent=1 // loop_header_branch
      %18 = sbr.rel (%p16) target = $region8
    $region5: #{tpu_custom_call.1} parent=1 // loop_body
      %s20 = ssub.s32 %s15, 1
      %s21 = ssub.s32 %s15, 2
      %s28 = sadd.s32 1, %s23
      %p29 = scmp.ge.s32.totalorder %s28, 1
      %s30 = scalar_select %p29, 0, %s28
      %s31 = sadd.s32 1, %s22
      %s32 = scalar_select %p29, %s31, %s22
      %p33 = scmp.ge.s32.totalorder %s32, 2
      %s34 = scalar_select %p33, 0, %s32
      %s35 = ssub.s32 %s22, %s34
      %s36 = ssub.s32 %s23, %s30
      %s37 = sor.u32 %s35, %s36
      %p38 = scmp.eq.s32.totalorder %s37, 0
      %s40 = sadd.s32 %s39, 1
      %s41 = scalar_select %p38, %s39, %s40
      %p44 = pneg %p38
      %p45 = scmp.eq.s32.totalorder %s15, 1
      %p46 = por %p44, %p45
      %p47 = scmp.ne.s32.totalorder %s39, %s42
      %p48 = scmp.eq.s32.totalorder %s15, 0
      %p49 = por %p47, %p48
      %p50 = scmp.ne.s32.totalorder %s39, %s42
      %p51 = scmp.eq.s32.totalorder %s20, 1
      %p52 = por %p50, %p51
      %p53 = scmp.ne.s32.totalorder %s42, %s43
      %p54 = scmp.eq.s32.totalorder %s20, 0
      %p55 = por %p53, %p54
      %p56 = scmp.ne.s32.totalorder %s42, %s43
      %p57 = scmp.eq.s32.totalorder %s21, 1
      %p58 = por %p56, %p57
      %p60 = scmp.ne.s32.totalorder %s43, %s59
      %p61 = scmp.eq.s32.totalorder %s21, 0
      %p62 = por %p60, %p61
      %s64 = sadd.s32 %s63, 1
      %p67 = scmp.eq.s32.totalorder %s15, 1
      %p68 = scmp.ne.s32.totalorder %s63, %s65
      %p69 = scmp.eq.s32.totalorder %s15, 0
      %p70 = por %p68, %p69
      %p71 = scmp.ne.s32.totalorder %s63, %s65
      %p72 = scmp.eq.s32.totalorder %s20, 1
      %p73 = por %p71, %p72
      %p74 = scmp.ne.s32.totalorder %s65, %s66
      %p75 = scmp.eq.s32.totalorder %s20, 0
      %p76 = por %p74, %p75
      %p77 = scmp.ne.s32.totalorder %s65, %s66
      %p78 = scmp.eq.s32.totalorder %s21, 1
      %p79 = por %p77, %p78
      %p81 = scmp.ne.s32.totalorder %s66, %s80
      %p82 = scmp.eq.s32.totalorder %s21, 0
      %p83 = por %p81, %p82
      %s85 = sadd.s32 %s84, 1
      %p88 = scmp.eq.s32.totalorder %s15, 1
      %p89 = scmp.ne.s32.totalorder %s84, %s86
      %p90 = scmp.eq.s32.totalorder %s15, 0
      %p91 = por %p89, %p90
      %p92 = scmp.ne.s32.totalorder %s84, %s86
      %p93 = scmp.eq.s32.totalorder %s20, 1
      %p94 = por %p92, %p93
      %p95 = scmp.ne.s32.totalorder %s86, %s87
      %p96 = scmp.eq.s32.totalorder %s20, 0
      %p97 = por %p95, %p96
      %p98 = scmp.ne.s32.totalorder %s86, %s87
      %p99 = scmp.eq.s32.totalorder %s21, 1
      %p100 = por %p98, %p99
      %p102 = scmp.ne.s32.totalorder %s87, %s101
      %p103 = scmp.eq.s32.totalorder %s21, 0
      %p104 = por %p102, %p103
      %s105 = ssub.s32 %s22, %s34
      %s106 = ssub.s32 %s23, %s30
      %s107 = sor.u32 %s105, %s106
      %p108 = scmp.eq.s32.totalorder %s107, 0
      %s110 = sadd.s32 %s109, 1
      %s111 = scalar_select %p108, %s109, %s110
      %p114 = pneg %p108
      %p115 = scmp.eq.s32.totalorder %s15, 1
      %p116 = por %p114, %p115
      %p117 = scmp.ne.s32.totalorder %s109, %s112
      %p118 = scmp.eq.s32.totalorder %s15, 0
      %p119 = por %p117, %p118
      %p120 = scmp.ne.s32.totalorder %s109, %s112
      %p121 = scmp.eq.s32.totalorder %s20, 1
      %p122 = por %p120, %p121
      %p123 = scmp.ne.s32.totalorder %s112, %s113
      %p124 = scmp.eq.s32.totalorder %s20, 0
      %p125 = por %p123, %p124
      %p126 = scmp.ne.s32.totalorder %s112, %s113
      %p127 = scmp.eq.s32.totalorder %s21, 1
      %p128 = por %p126, %p127
      %p130 = scmp.ne.s32.totalorder %s113, %s129
      %p131 = scmp.eq.s32.totalorder %s21, 0
      %p132 = por %p130, %p131
      %p133 = scmp.le.s32.totalorder 1, %s15
      %p134 = scmp.lt.s32.totalorder %s15, 3
      %p135 = pnand %p133, %p134
      %p136 = pneg %p135
      // Predicated region
      $region9: #{tpu_custom_call.1} parent=5 // pred_check
        _
      $region10: #{tpu_custom_call.1} parent=5 // pred_check_branch
        %138 = sbr.rel (%p135) target = $region12
      $region11: #{tpu_custom_call.1} parent=5 // pred_region
        %s139 = ssub.s32 %s15, 1
        // Predicated region
        $region13: #{tpu_custom_call.1} parent=11 // pred_check
          %p140 = pneg %p76
        $region14: #{tpu_custom_call.1} parent=11 // pred_check_branch
          %142 = sbr.rel (%p140) target = $region16
        $region15: #{tpu_custom_call.1} parent=11 // pred_region
          _
        $region16: #{tpu_custom_call.1} parent=11 // pred_fallthru
          _
        // Predicated region
        $region17: #{tpu_custom_call.1} parent=11 // pred_check
          %p143 = pneg %p97
        $region18: #{tpu_custom_call.1} parent=11 // pred_check_branch
          %145 = sbr.rel (%p143) target = $region20
        $region19: #{tpu_custom_call.1} parent=11 // pred_region
          _
        $region20: #{tpu_custom_call.1} parent=11 // pred_fallthru
          _
      $region12: #{tpu_custom_call.1} parent=5 // pred_fallthru
        _
      %p146 = scmp.lt.s32.totalorder %s15, 2
      // Predicated region
      $region21: #{tpu_custom_call.1} parent=5 // pred_check
        %p147 = pneg %p146
      $region22: #{tpu_custom_call.1} parent=5 // pred_check_branch
        %149 = sbr.rel (%p147) target = $region24
      $region23: #{tpu_custom_call.1} parent=5 // pred_region
        // Predicated region
        $region25: #{tpu_custom_call.1} parent=23 // pred_check
          %p150 = pneg %p49
        $region26: #{tpu_custom_call.1} parent=23 // pred_check_branch
          %152 = sbr.rel (%p150) target = $region28
        $region27: #{tpu_custom_call.1} parent=23 // pred_region
          %s153 = sand.u32 %s39, 1
          %s154 = scalar_lea.sflag [#allocation3], %s153
          %s155 = sand.u32 %s39, 1
          %s156 = smul.addr %s155, 32
          %s157 = scalar_lea.vmem [#allocation2], %s156
          %s159 = ssub.s32 512, 512
          %160 = vsyncadd %s154, %s159
          %s161 = smul.addr %s22, 4
          %s162 = sadd.s32 %s23, %s161
          %s163 = smul.addr %s162, 128
          %s164 = scalar_lea.hbm %s0, %s163
          %s165 = sshll.u32 %s157, 4
          %s166 = int_to_ptr.vmem [resolvable:$true] %s165
          %171 = dma.hbm_to_vmem [thread:$0]  %s164, 512, %s166, %s154, 128, 128, 8
        $region28: #{tpu_custom_call.1} parent=23 // pred_fallthru
          _
      $region24: #{tpu_custom_call.1} parent=5 // pred_fallthru
        _
      %p172 = scmp.le.s32.totalorder 1, %s15
      %p173 = scmp.lt.s32.totalorder %s15, 3
      %p174 = pnand %p172, %p173
      %p175 = pneg %p174
      // Predicated region
      $region29: #{tpu_custom_call.1} parent=5 // pred_check
        _
      $region30: #{tpu_custom_call.1} parent=5 // pred_check_branch
        %177 = sbr.rel (%p174) target = $region32
      $region31: #{tpu_custom_call.1} parent=5 // pred_region
        %s178 = ssub.s32 %s15, 1
        %s179 = sand.u32 %s42, 1
        %s180 = scalar_lea.sflag [#allocation3], %s179
        %s181 = sand.u32 %s42, 1
        %s182 = smul.addr %s181, 32
        %s183 = scalar_lea.vmem [#allocation2], %s182
        // Predicated region
        $region33: #{tpu_custom_call.1} parent=31 // pred_check
          %p184 = pneg %p55
        $region34: #{tpu_custom_call.1} parent=31 // pred_check_branch
          %186 = sbr.rel (%p184) target = $region36
        $region35: #{tpu_custom_call.1} parent=31 // pred_region
          %187 = dma.done %s180, 512
        $region36: #{tpu_custom_call.1} parent=31 // pred_fallthru
          _
        %s188 = sand.u32 %s42, 1
        %s189 = scalar_lea.sflag [#allocation3], %s188
        %s190 = sand.u32 %s42, 1
        %s191 = smul.addr %s190, 32
        %s192 = scalar_lea.vmem [#allocation2], %s191
        %p193 = pneg %p55
        %p194 = pneg %p52
        %p195 = pneg %p76
        %p196 = pneg %p73
        %p197 = pneg %p97
        %p198 = pneg %p94
        %p199 = pneg %p125
        %p200 = pneg %p122
        %s201 = sand.u32 %s112, 1
        %s202 = scalar_lea.sflag [#allocation4], %s201
        %s203 = sand.u32 %s112, 1
        %s204 = smul.addr %s203, 16
        %s205 = scalar_lea.vmem [#allocation5], %s204
        %v207 = vld [vmem:[%s183] sm:$0xff]
        %v208 = vld [vmem:[%s183 + $0x8] sm:$0xff]
        %v209 = vld [vmem:[%s183 + $0x10] sm:$0xff]
        %v210 = vld [vmem:[%s183 + $0x18] sm:$0xff]
        %v211 = vpack.c.bf16 %v208, %v207
        %v212 = vpack.c.bf16 %v210, %v209
        %v213 = vld [vmem:[%s1] sm:$0xf]
        %v214 = vld [vmem:[%s1 + $0x4] sm:$0xf]
        %v215 = vld [vmem:[%s2] sm:$0xff]
        %v216 = vld [vmem:[%s2 + $0x8] sm:$0xff]
        %218 = vset.pattern.permute.xlu0 0
        %219 = vperm.xlu0 %218, %v215
        %v220 = vpop.permute.xlu0 %219
        %223 = vset.pattern.permute.xlu0 0
        %224 = vperm.xlu0 %223, %v216
        %v225 = vpop.permute.xlu0 %224
        %v229 = vunpack.c.l.b16 %v213
        %v230 = vunpack.c.l.b16 %v214
        %v231 = vpack.c.b16 %v230, %v229
        %vm232 = vcmask 261120
        %v234 = vsel %vm232, %v231, 0
        %236 = vmatprep.subr.bf16.mxu0 0
        %237 = vmatpush1.bf16.msra.mxu0 0
        %238 = vmatprep.subr.bf16.mxu0 0
        %239 = vmatpush1.bf16.msra.mxu0 0
        %240 = vmatprep.subr.bf16.mxu0 0
        %241 = vmatpush1.bf16.msra.mxu0 0
        %242 = vmatprep.subr.bf16.mxu0 0
        %243 = vmatpush1.bf16.msra.mxu0 0
        %244 = vmatprep.subr.bf16.mxu0 0
        %245 = vmatpush1.bf16.msra.mxu0 0
        %246 = vmatprep.subr.bf16.mxu0 0
        %247 = vmatpush1.bf16.msra.mxu0 0
        %248 = vmatprep.subr.bf16.mxu0 0
        %249 = vmatpush1.bf16.msra.mxu0 %v212
        %250 = vmatprep.subr.bf16.mxu0 0
        %251 = vmatpush1.bf16.msra.mxu0 %v211
        %252 = vmatprep.subr.bf16.mxu0 0
        %253 = vmatpush2.bf16.msra.mxu0 0
        %254 = vmatprep.subr.bf16.mxu0 0
        %255 = vmatpush2.bf16.msra.mxu0 0
        %256 = vmatprep.subr.bf16.mxu0 0
        %257 = vmatpush2.bf16.msra.mxu0 0
        %258 = vmatprep.subr.bf16.mxu0 0
        %259 = vmatpush2.bf16.msra.mxu0 0
        %260 = vmatprep.subr.bf16.mxu0 0
        %261 = vmatpush2.bf16.msra.mxu0 0
        %262 = vmatprep.subr.bf16.mxu0 0
        %263 = vmatpush2.bf16.msra.mxu0 0
        %264 = vmatprep.subr.bf16.mxu0 0
        %265 = vmatpush2.bf16.msra.mxu0 0
        %266 = vmatprep.subr.bf16.mxu0 0
        %267 = vmatpush2.bf16.msra.mxu0 0
        %268 = vmatprep.mubr.bf16.mxu0 0
        %269 = vmatmul.mubr.bf16.gmra.mxu0 %v234
        %v270 = vpop.f32.mrf.mxu0
        %v271 = vadd.f32 %v220, %v270
        %v272 = vpop.f32.mrf.mxu0
        %v273 = vpop.f32.mrf.mxu0
        %v274 = vadd.f32 %v225, %v273
        %v275 = vpop.f32.mrf.mxu0
        %276 = vdwg.mxu0
        %v277 = vmax.f32 %v271, 0.0
        %v278 = vmax.f32 %v274, 0.0
        %279 = vst [vmem:[%s205] sm:$0xff] %v277
        %280 = vst [vmem:[%s205 + $0x8] sm:$0xff] %v278
        %s281 = sand.u32 %s112, 1
        %s282 = scalar_lea.sflag [#allocation4], %s281
        %s283 = sand.u32 %s112, 1
        %s284 = smul.addr %s283, 16
        %s285 = scalar_lea.vmem [#allocation5], %s284
        // Predicated region
        $region37: #{tpu_custom_call.1} parent=31 // pred_check
          %p286 = pneg %p122
        $region38: #{tpu_custom_call.1} parent=31 // pred_check_branch
          %288 = sbr.rel (%p286) target = $region40
        $region39: #{tpu_custom_call.1} parent=31 // pred_region
          %s290 = ssub.s32 256, 256
          %291 = vsyncadd %s282, %s290
          %s292 = smul.addr %s24, 2
          %s293 = sadd.s32 %s25, %s292
          %s294 = smul.addr %s293, 128
          %s295 = scalar_lea.hbm %s3, %s294
          %s296 = sshll.u32 %s285, 4
          %s297 = int_to_ptr.vmem [resolvable:$true] %s296
          %302 = dma.vmem_to_hbm [thread:$0]  %s297, 256, %s295, %s282, 128, 128, 8
        $region40: #{tpu_custom_call.1} parent=31 // pred_fallthru
          _
      $region32: #{tpu_custom_call.1} parent=5 // pred_fallthru
        _
      %p303 = scmp.le.s32.totalorder 2, %s15
      // Predicated region
      $region41: #{tpu_custom_call.1} parent=5 // pred_check
        %p304 = pneg %p303
      $region42: #{tpu_custom_call.1} parent=5 // pred_check_branch
        %306 = sbr.rel (%p304) target = $region44
      $region43: #{tpu_custom_call.1} parent=5 // pred_region
        %s307 = ssub.s32 %s15, 2
        // Predicated region
        $region45: #{tpu_custom_call.1} parent=43 // pred_check
          %p308 = pneg %p128
        $region46: #{tpu_custom_call.1} parent=43 // pred_check_branch
          %310 = sbr.rel (%p308) target = $region48
        $region47: #{tpu_custom_call.1} parent=43 // pred_region
          %s311 = sand.u32 %s113, 1
          %s312 = scalar_lea.sflag [#allocation4], %s311
          %s313 = sand.u32 %s113, 1
          %s314 = smul.addr %s313, 16
          %s315 = scalar_lea.vmem [#allocation5], %s314
          %316 = dma.done %s312, 256
        $region48: #{tpu_custom_call.1} parent=43 // pred_fallthru
          _
      $region44: #{tpu_custom_call.1} parent=5 // pred_fallthru
        _
    $region6: #{tpu_custom_call.1} parent=1 // loop_footer
      %s19 = sadd.s32 1, %s15
    $region7: #{tpu_custom_call.1} parent=1 // loop_footer_branch
      %14 = sbr.rel target = $region3
    $region8: #{tpu_custom_call.1} parent=1 // loop_exit
      _
    %317 = vsyncpa [#allocation3], 1
    %s318 = scalar_lea.sflag [#allocation3], 1
    %319 = vsyncpa %s318, 1
    %320 = vsyncpa [#allocation4], 1
    %s321 = scalar_lea.sflag [#allocation4], 1
    %322 = vsyncpa %s321, 1

</llo_original>
